<compile_context>
chip_gen: v6e
topology: v6e:2x2x1
jax: 0.10.0
libtpu: 0.0.40
codegen_flags: <defaults>
</compile_context>

<pallas_src>
import functools

import jax
import jax.numpy as jnp
from jax.experimental import pallas as pl
from jax.experimental.pallas import tpu as pltpu

G = 0.08  # control-signal gain from AE_ctrl_sig.forward


def _cdiv(a, b):
    return (a + b - 1) // b


def _round_up(x, m):
    return _cdiv(x, m) * m


# ----------------------------------------------------------------------------
# Fused kernel: whole encoder + decoder on one batch tile.
# Weight layout (all bf16, pre-transposed to (in, out)):
#   w_in_ref  : (d_in, H)           encoder input layer
#   w_hid_ref : (2*no_layers, H, H) encoder hidden layers then decoder hidden
#   w_eo_ref  : (H, latent)         encoder -> latent layer
#   w_di_ref  : (latent, H)         decoder input layer
#   w_out_ref : (H, d_out)          decoder output layer
#   b_ref     : (n_layers, max_w)   all biases, zero-padded rows, f32
# ----------------------------------------------------------------------------
def _fused_ae_kernel(x_ref, w_in_ref, w_hid_ref, w_eo_ref, w_di_ref, w_out_ref,
                     b_ref, o_ref, *, no_layers, hidden, latent, d_out):
    def layer(h, w, li, n, last=False):
        # bf16 x bf16 -> f32 MXU matmul; bias add / activation epilogue in f32.
        acc = jnp.dot(h, w, preferred_element_type=jnp.float32)
        acc = acc + b_ref[li:li + 1, :n]                 # static slice, (1, n)
        if last:
            # Final decoder layer: sigmoid, then the module-level
            # "* g + (1 - g/2)" affine folded in.
            return jax.nn.sigmoid(acc) * G + (1.0 - G / 2.0)
        # relu fused with the bf16 downcast: the next matmul consumes bf16
        # anyway, so carrying activations in bf16 is pure savings.
        return jnp.maximum(acc, 0.0).astype(jnp.bfloat16)

    h = x_ref[...].astype(jnp.bfloat16)

    li = 0
    h = layer(h, w_in_ref[...], li, hidden); li += 1              # encoder in
    for j in range(no_layers):                                    # encoder hidden
        h = layer(h, w_hid_ref[j], li, hidden); li += 1
    h = layer(h, w_eo_ref[...], li, latent); li += 1              # encoder -> latent
    h = layer(h, w_di_ref[...], li, hidden); li += 1              # decoder in
    for j in range(no_layers):                                    # decoder hidden
        h = layer(h, w_hid_ref[no_layers + j], li, hidden); li += 1
    out = layer(h, w_out_ref[...], li, d_out, last=True)          # decoder out
    o_ref[...] = out.astype(o_ref.dtype)


def _pick_tm(b, cap=1024):
    """Batch tile: no padding, no output slicing ever needed."""
    if b <= 8:
        return b  # single block == full batch dims (always a legal BlockSpec)
    # Largest multiple-of-8 tile <= cap, but at least 2 grid steps so the
    # "parallel" batch axis can shard across v7x's 2 TensorCores.  If the tile
    # doesn't divide b, the last (ragged) block's out-of-bounds rows are
    # simply not written by Pallas.
    return min(cap, _round_up(_cdiv(b, 2), 8))


# ----------------------------------------------------------------------------
# Wrapper: flatten input, one pallas_call for the whole network.
# ----------------------------------------------------------------------------
def forward(params, x, *, tm_cap=1024):
    w_in, w_hid, w_eo, w_di, w_out, b_stack = params
    b = x.shape[0]
    # Accept the caller's dtype directly (no forced f32 cast / extra HBM pass);
    # the kernel casts to bf16 before the first matmul regardless.
    x2 = x.reshape(b, -1)
    d_in = x2.shape[1]
    hidden = w_in.shape[1]
    latent = w_eo.shape[1]
    d_out = w_out.shape[1]
    no_layers = w_hid.shape[0] // 2

    tm = _pick_tm(b, tm_cap)
    grid = _cdiv(b, tm)

    kernel = functools.partial(_fused_ae_kernel, no_layers=no_layers,
                               hidden=hidden, latent=latent, d_out=d_out)

    # Advisory cost hint so XLA can schedule neighbors around the custom call.
    flops = 2 * b * (d_in * hidden + 2 * no_layers * hidden * hidden
                     + 2 * hidden * latent + hidden * d_out)
    weight_bytes = sum(int(a.size) * a.dtype.itemsize
                       for a in (w_in, w_hid, w_eo, w_di, w_out, b_stack))
    bytes_accessed = (int(x2.size) * x2.dtype.itemsize
                      + b * d_out * x2.dtype.itemsize + weight_bytes)
    cost = pl.CostEstimate(flops=flops, transcendentals=b * d_out,
                           bytes_accessed=bytes_accessed)

    return pl.pallas_call(
        kernel,
        out_shape=jax.ShapeDtypeStruct((b, d_out), x2.dtype),
        grid=(grid,),
        in_specs=[
            pl.BlockSpec((tm, d_in), lambda i: (i, 0)),       # batch-tiled input
            pl.BlockSpec(w_in.shape, lambda i: (0, 0)),       # resident weights
            pl.BlockSpec(w_hid.shape, lambda i: (0, 0, 0)),
            pl.BlockSpec(w_eo.shape, lambda i: (0, 0)),
            pl.BlockSpec(w_di.shape, lambda i: (0, 0)),
            pl.BlockSpec(w_out.shape, lambda i: (0, 0)),
            pl.BlockSpec(b_stack.shape, lambda i: (0, 0)),
        ],
        out_specs=pl.BlockSpec((tm, d_out), lambda i: (i, 0)),
        compiler_params=pltpu.CompilerParams(
            dimension_semantics=("parallel",)),
        cost_estimate=cost,
    )(x2, w_in, w_hid, w_eo, w_di, w_out, b_stack)


# ----------------------------------------------------------------------------
# Parameters: Xavier-normal weights pre-transposed to (in, out) in bf16,
# zero biases (f32), matching the PyTorch init (xavier_normal_, bias=0).
# ----------------------------------------------------------------------------
def _xavier(key, fan_in, fan_out):
    std = (2.0 / (fan_in + fan_out)) ** 0.5
    return (jax.random.normal(key, (fan_in, fan_out), jnp.float32) * std
            ).astype(jnp.bfloat16)


def init_params(key, inp_dim, hidden_size, latent_dim, no_layers):
    d_in = 1
    for d in inp_dim:
        d_in *= int(d)
    n_layers = 2 * no_layers + 4
    keys = list(jax.random.split(key, n_layers))

    w_enc_in = _xavier(keys[0], d_in, hidden_size)
    enc_hid = [_xavier(keys[1 + j], hidden_size, hidden_size)
               for j in range(no_layers)]
    w_enc_out = _xavier(keys[1 + no_layers], hidden_size, latent_dim)
    w_dec_in = _xavier(keys[2 + no_layers], latent_dim, hidden_size)
    dec_hid = [_xavier(keys[3 + no_layers + j], hidden_size, hidden_size)
               for j in range(no_layers)]
    w_dec_out = _xavier(keys[3 + 2 * no_layers], hidden_size, d_in)

    # All identical (H,H) hidden layers stacked into one array; all biases
    # (zero, matching nn.init.constant_(bias, 0)) packed into one (L, max_w)
    # array -> only 7 kernel inputs total instead of 21.
    w_hid = jnp.stack(enc_hid + dec_hid, axis=0)
    max_w = max(hidden_size, latent_dim, d_in)
    b_stack = jnp.zeros((n_layers, max_w), jnp.float32)

    return (w_enc_in, w_hid, w_enc_out, w_dec_in, w_dec_out, b_stack)


if __name__ == "__main__":
    INP_DIM = (16, 16)      # prod = 256 -> lane-dense (multiple of 128) output
    HIDDEN = 32
    LATENT = 8
    NO_LAYERS = 3
    BATCH = 2

    key = jax.random.PRNGKey(0)
    pkey, xkey = jax.random.split(key)
    params = init_params(pkey, INP_DIM, HIDDEN, LATENT, NO_LAYERS)
    # Encoder accepts (B, H, W) and flattens, like the PyTorch module.
    x = jax.random.normal(xkey, (BATCH,) + INP_DIM, jnp.float32)

    fwd = jax.jit(forward)
    out = jax.block_until_ready(fwd(params, x))

    assert out.shape == (BATCH, INP_DIM[0] * INP_DIM[1])
    assert bool(jnp.all(jnp.isfinite(out)))
    # out = sigmoid(.) * g + (1 - g/2) with g = 0.08 -> values in (0.96, 1.04)
    assert bool(jnp.all(out >= 1.0 - G / 2 - 1e-3))
    assert bool(jnp.all(out <= 1.0 + G / 2 + 1e-3))
    print("KERNEL_OK")
</pallas_src>

<mosaic_0001>
module attributes {stable_mosaic.version = 11 : i64} {
  func.func @_fused_ae_kernel(%arg0: i32, %arg1: memref<2x256xf32, #tpu.memory_space<vmem>>, %arg2: memref<256x32xbf16, #tpu.memory_space<vmem>>, %arg3: memref<6x32x32xbf16, #tpu.memory_space<vmem>>, %arg4: memref<32x8xbf16, #tpu.memory_space<vmem>>, %arg5: memref<8x32xbf16, #tpu.memory_space<vmem>>, %arg6: memref<32x256xbf16, #tpu.memory_space<vmem>>, %arg7: memref<10x256xf32, #tpu.memory_space<vmem>>, %arg8: memref<2x256xf32, #tpu.memory_space<vmem>>) attributes {dimension_semantics = [#tpu.dimension_semantics<parallel>], iteration_bounds = array<i64: 1>, scalar_prefetch = 0 : i64, scratch_operands = 0 : i64, tpu.core_type = #tpu.core_type<tc>, window_params = [{transform_indices = @transform_0, window_bounds = array<i64: 2, 256>}, {pipeline_mode = #tpu.pipeline_mode<synchronous>, transform_indices = @transform_1, window_bounds = array<i64: 256, 32>}, {pipeline_mode = #tpu.pipeline_mode<synchronous>, transform_indices = @transform_2, window_bounds = array<i64: 6, 32, 32>}, {pipeline_mode = #tpu.pipeline_mode<synchronous>, transform_indices = @transform_3, window_bounds = array<i64: 32, 8>}, {pipeline_mode = #tpu.pipeline_mode<synchronous>, transform_indices = @transform_4, window_bounds = array<i64: 8, 32>}, {pipeline_mode = #tpu.pipeline_mode<synchronous>, transform_indices = @transform_5, window_bounds = array<i64: 32, 256>}, {pipeline_mode = #tpu.pipeline_mode<synchronous>, transform_indices = @transform_6, window_bounds = array<i64: 10, 256>}, {transform_indices = @transform_7, window_bounds = array<i64: 2, 256>}]} {
    %c0 = arith.constant 0 : index
    %c0_0 = arith.constant 0 : index
    %0 = vector.load %arg1[%c0, %c0_0] : memref<2x256xf32, #tpu.memory_space<vmem>>, vector<2x256xf32>
    %1 = arith.truncf %0 : vector<2x256xf32> to vector<2x256xbf16>
    %c0_1 = arith.constant 0 : index
    %c0_2 = arith.constant 0 : index
    %2 = vector.load %arg2[%c0_1, %c0_2] : memref<256x32xbf16, #tpu.memory_space<vmem>>, vector<256x32xbf16>
    %cst = arith.constant dense<0.000000e+00> : vector<2x32xf32>
    %3 = tpu.matmul %1, %2, %cst {dimension_numbers = #tpu.dot_dimension_numbers<[1], [0], [0], [1], [0, 0, 1, 1], [], []>} : vector<2x256xbf16>, vector<256x32xbf16>, vector<2x32xf32> -> vector<2x32xf32>
    %c0_3 = arith.constant 0 : index
    %c0_4 = arith.constant 0 : index
    %4 = vector.load %arg7[%c0_3, %c0_4] : memref<10x256xf32, #tpu.memory_space<vmem>>, vector<1x32xf32>
    %5 = vector.broadcast %4 : vector<1x32xf32> to vector<2x32xf32>
    %6 = arith.addf %3, %5 : vector<2x32xf32>
    %cst_5 = arith.constant 0.000000e+00 : f32
    %7 = vector.broadcast %cst_5 : f32 to vector<2x32xf32>
    %8 = arith.maximumf %6, %7 : vector<2x32xf32>
    %9 = arith.truncf %8 : vector<2x32xf32> to vector<2x32xbf16>
    %c0_6 = arith.constant 0 : index
    %c0_7 = arith.constant 0 : index
    %c0_8 = arith.constant 0 : index
    %10 = vector.load %arg3[%c0_6, %c0_7, %c0_8] : memref<6x32x32xbf16, #tpu.memory_space<vmem>>, vector<1x32x32xbf16>
    %11 = vector.shape_cast %10 : vector<1x32x32xbf16> to vector<32x32xbf16>
    %cst_9 = arith.constant dense<0.000000e+00> : vector<2x32xf32>
    %12 = tpu.matmul %9, %11, %cst_9 {dimension_numbers = #tpu.dot_dimension_numbers<[1], [0], [0], [1], [0, 0, 1, 1], [], []>} : vector<2x32xbf16>, vector<32x32xbf16>, vector<2x32xf32> -> vector<2x32xf32>
    %c1 = arith.constant 1 : index
    %c0_10 = arith.constant 0 : index
    %13 = vector.load %arg7[%c1, %c0_10] : memref<10x256xf32, #tpu.memory_space<vmem>>, vector<1x32xf32>
    %14 = vector.broadcast %13 : vector<1x32xf32> to vector<2x32xf32>
    %15 = arith.addf %12, %14 : vector<2x32xf32>
    %cst_11 = arith.constant 0.000000e+00 : f32
    %16 = vector.broadcast %cst_11 : f32 to vector<2x32xf32>
    %17 = arith.maximumf %15, %16 : vector<2x32xf32>
    %18 = arith.truncf %17 : vector<2x32xf32> to vector<2x32xbf16>
    %c1_12 = arith.constant 1 : index
    %c0_13 = arith.constant 0 : index
    %c0_14 = arith.constant 0 : index
    %19 = vector.load %arg3[%c1_12, %c0_13, %c0_14] : memref<6x32x32xbf16, #tpu.memory_space<vmem>>, vector<1x32x32xbf16>
    %20 = vector.shape_cast %19 : vector<1x32x32xbf16> to vector<32x32xbf16>
    %cst_15 = arith.constant dense<0.000000e+00> : vector<2x32xf32>
    %21 = tpu.matmul %18, %20, %cst_15 {dimension_numbers = #tpu.dot_dimension_numbers<[1], [0], [0], [1], [0, 0, 1, 1], [], []>} : vector<2x32xbf16>, vector<32x32xbf16>, vector<2x32xf32> -> vector<2x32xf32>
    %c2 = arith.constant 2 : index
    %c0_16 = arith.constant 0 : index
    %22 = vector.load %arg7[%c2, %c0_16] : memref<10x256xf32, #tpu.memory_space<vmem>>, vector<1x32xf32>
    %23 = vector.broadcast %22 : vector<1x32xf32> to vector<2x32xf32>
    %24 = arith.addf %21, %23 : vector<2x32xf32>
    %cst_17 = arith.constant 0.000000e+00 : f32
    %25 = vector.broadcast %cst_17 : f32 to vector<2x32xf32>
    %26 = arith.maximumf %24, %25 : vector<2x32xf32>
    %27 = arith.truncf %26 : vector<2x32xf32> to vector<2x32xbf16>
    %c2_18 = arith.constant 2 : index
    %c0_19 = arith.constant 0 : index
    %c0_20 = arith.constant 0 : index
    %28 = vector.load %arg3[%c2_18, %c0_19, %c0_20] : memref<6x32x32xbf16, #tpu.memory_space<vmem>>, vector<1x32x32xbf16>
    %29 = vector.shape_cast %28 : vector<1x32x32xbf16> to vector<32x32xbf16>
    %cst_21 = arith.constant dense<0.000000e+00> : vector<2x32xf32>
    %30 = tpu.matmul %27, %29, %cst_21 {dimension_numbers = #tpu.dot_dimension_numbers<[1], [0], [0], [1], [0, 0, 1, 1], [], []>} : vector<2x32xbf16>, vector<32x32xbf16>, vector<2x32xf32> -> vector<2x32xf32>
    %c3 = arith.constant 3 : index
    %c0_22 = arith.constant 0 : index
    %31 = vector.load %arg7[%c3, %c0_22] : memref<10x256xf32, #tpu.memory_space<vmem>>, vector<1x32xf32>
    %32 = vector.broadcast %31 : vector<1x32xf32> to vector<2x32xf32>
    %33 = arith.addf %30, %32 : vector<2x32xf32>
    %cst_23 = arith.constant 0.000000e+00 : f32
    %34 = vector.broadcast %cst_23 : f32 to vector<2x32xf32>
    %35 = arith.maximumf %33, %34 : vector<2x32xf32>
    %36 = arith.truncf %35 : vector<2x32xf32> to vector<2x32xbf16>
    %c0_24 = arith.constant 0 : index
    %c0_25 = arith.constant 0 : index
    %37 = vector.load %arg4[%c0_24, %c0_25] : memref<32x8xbf16, #tpu.memory_space<vmem>>, vector<32x8xbf16>
    %cst_26 = arith.constant dense<0.000000e+00> : vector<2x8xf32>
    %38 = tpu.matmul %36, %37, %cst_26 {dimension_numbers = #tpu.dot_dimension_numbers<[1], [0], [0], [1], [0, 0, 1, 1], [], []>} : vector<2x32xbf16>, vector<32x8xbf16>, vector<2x8xf32> -> vector<2x8xf32>
    %c4 = arith.constant 4 : index
    %c0_27 = arith.constant 0 : index
    %39 = vector.load %arg7[%c4, %c0_27] : memref<10x256xf32, #tpu.memory_space<vmem>>, vector<1x8xf32>
    %40 = vector.broadcast %39 : vector<1x8xf32> to vector<2x8xf32>
    %41 = arith.addf %38, %40 : vector<2x8xf32>
    %cst_28 = arith.constant 0.000000e+00 : f32
    %42 = vector.broadcast %cst_28 : f32 to vector<2x8xf32>
    %43 = arith.maximumf %41, %42 : vector<2x8xf32>
    %44 = arith.truncf %43 : vector<2x8xf32> to vector<2x8xbf16>
    %c0_29 = arith.constant 0 : index
    %c0_30 = arith.constant 0 : index
    %45 = vector.load %arg5[%c0_29, %c0_30] : memref<8x32xbf16, #tpu.memory_space<vmem>>, vector<8x32xbf16>
    %cst_31 = arith.constant dense<0.000000e+00> : vector<2x32xf32>
    %46 = tpu.matmul %44, %45, %cst_31 {dimension_numbers = #tpu.dot_dimension_numbers<[1], [0], [0], [1], [0, 0, 1, 1], [], []>} : vector<2x8xbf16>, vector<8x32xbf16>, vector<2x32xf32> -> vector<2x32xf32>
    %c5 = arith.constant 5 : index
    %c0_32 = arith.constant 0 : index
    %47 = vector.load %arg7[%c5, %c0_32] : memref<10x256xf32, #tpu.memory_space<vmem>>, vector<1x32xf32>
    %48 = vector.broadcast %47 : vector<1x32xf32> to vector<2x32xf32>
    %49 = arith.addf %46, %48 : vector<2x32xf32>
    %cst_33 = arith.constant 0.000000e+00 : f32
    %50 = vector.broadcast %cst_33 : f32 to vector<2x32xf32>
    %51 = arith.maximumf %49, %50 : vector<2x32xf32>
    %52 = arith.truncf %51 : vector<2x32xf32> to vector<2x32xbf16>
    %c3_34 = arith.constant 3 : index
    %c0_35 = arith.constant 0 : index
    %c0_36 = arith.constant 0 : index
    %53 = vector.load %arg3[%c3_34, %c0_35, %c0_36] : memref<6x32x32xbf16, #tpu.memory_space<vmem>>, vector<1x32x32xbf16>
    %54 = vector.shape_cast %53 : vector<1x32x32xbf16> to vector<32x32xbf16>
    %cst_37 = arith.constant dense<0.000000e+00> : vector<2x32xf32>
    %55 = tpu.matmul %52, %54, %cst_37 {dimension_numbers = #tpu.dot_dimension_numbers<[1], [0], [0], [1], [0, 0, 1, 1], [], []>} : vector<2x32xbf16>, vector<32x32xbf16>, vector<2x32xf32> -> vector<2x32xf32>
    %c6 = arith.constant 6 : index
    %c0_38 = arith.constant 0 : index
    %56 = vector.load %arg7[%c6, %c0_38] : memref<10x256xf32, #tpu.memory_space<vmem>>, vector<1x32xf32>
    %57 = vector.broadcast %56 : vector<1x32xf32> to vector<2x32xf32>
    %58 = arith.addf %55, %57 : vector<2x32xf32>
    %cst_39 = arith.constant 0.000000e+00 : f32
    %59 = vector.broadcast %cst_39 : f32 to vector<2x32xf32>
    %60 = arith.maximumf %58, %59 : vector<2x32xf32>
    %61 = arith.truncf %60 : vector<2x32xf32> to vector<2x32xbf16>
    %c4_40 = arith.constant 4 : index
    %c0_41 = arith.constant 0 : index
    %c0_42 = arith.constant 0 : index
    %62 = vector.load %arg3[%c4_40, %c0_41, %c0_42] : memref<6x32x32xbf16, #tpu.memory_space<vmem>>, vector<1x32x32xbf16>
    %63 = vector.shape_cast %62 : vector<1x32x32xbf16> to vector<32x32xbf16>
    %cst_43 = arith.constant dense<0.000000e+00> : vector<2x32xf32>
    %64 = tpu.matmul %61, %63, %cst_43 {dimension_numbers = #tpu.dot_dimension_numbers<[1], [0], [0], [1], [0, 0, 1, 1], [], []>} : vector<2x32xbf16>, vector<32x32xbf16>, vector<2x32xf32> -> vector<2x32xf32>
    %c7 = arith.constant 7 : index
    %c0_44 = arith.constant 0 : index
    %65 = vector.load %arg7[%c7, %c0_44] : memref<10x256xf32, #tpu.memory_space<vmem>>, vector<1x32xf32>
    %66 = vector.broadcast %65 : vector<1x32xf32> to vector<2x32xf32>
    %67 = arith.addf %64, %66 : vector<2x32xf32>
    %cst_45 = arith.constant 0.000000e+00 : f32
    %68 = vector.broadcast %cst_45 : f32 to vector<2x32xf32>
    %69 = arith.maximumf %67, %68 : vector<2x32xf32>
    %70 = arith.truncf %69 : vector<2x32xf32> to vector<2x32xbf16>
    %c5_46 = arith.constant 5 : index
    %c0_47 = arith.constant 0 : index
    %c0_48 = arith.constant 0 : index
    %71 = vector.load %arg3[%c5_46, %c0_47, %c0_48] : memref<6x32x32xbf16, #tpu.memory_space<vmem>>, vector<1x32x32xbf16>
    %72 = vector.shape_cast %71 : vector<1x32x32xbf16> to vector<32x32xbf16>
    %cst_49 = arith.constant dense<0.000000e+00> : vector<2x32xf32>
    %73 = tpu.matmul %70, %72, %cst_49 {dimension_numbers = #tpu.dot_dimension_numbers<[1], [0], [0], [1], [0, 0, 1, 1], [], []>} : vector<2x32xbf16>, vector<32x32xbf16>, vector<2x32xf32> -> vector<2x32xf32>
    %c8 = arith.constant 8 : index
    %c0_50 = arith.constant 0 : index
    %74 = vector.load %arg7[%c8, %c0_50] : memref<10x256xf32, #tpu.memory_space<vmem>>, vector<1x32xf32>
    %75 = vector.broadcast %74 : vector<1x32xf32> to vector<2x32xf32>
    %76 = arith.addf %73, %75 : vector<2x32xf32>
    %cst_51 = arith.constant 0.000000e+00 : f32
    %77 = vector.broadcast %cst_51 : f32 to vector<2x32xf32>
    %78 = arith.maximumf %76, %77 : vector<2x32xf32>
    %79 = arith.truncf %78 : vector<2x32xf32> to vector<2x32xbf16>
    %c0_52 = arith.constant 0 : index
    %c0_53 = arith.constant 0 : index
    %80 = vector.load %arg6[%c0_52, %c0_53] : memref<32x256xbf16, #tpu.memory_space<vmem>>, vector<32x256xbf16>
    %cst_54 = arith.constant dense<0.000000e+00> : vector<2x256xf32>
    %81 = tpu.matmul %79, %80, %cst_54 {dimension_numbers = #tpu.dot_dimension_numbers<[1], [0], [0], [1], [0, 0, 1, 1], [], []>} : vector<2x32xbf16>, vector<32x256xbf16>, vector<2x256xf32> -> vector<2x256xf32>
    %c9 = arith.constant 9 : index
    %c0_55 = arith.constant 0 : index
    %82 = vector.load %arg7[%c9, %c0_55] : memref<10x256xf32, #tpu.memory_space<vmem>>, vector<1x256xf32>
    %83 = vector.broadcast %82 : vector<1x256xf32> to vector<2x256xf32>
    %84 = arith.addf %81, %83 : vector<2x256xf32>
    %85 = arith.negf %84 : vector<2x256xf32>
    %86 = math.exp %85 : vector<2x256xf32>
    %cst_56 = arith.constant 1.000000e+00 : f32
    %87 = vector.broadcast %cst_56 : f32 to vector<2x256xf32>
    %88 = arith.addf %87, %86 : vector<2x256xf32>
    %89 = arith.divf %87, %88 : vector<2x256xf32>
    %cst_57 = arith.constant 8.000000e-02 : f32
    %90 = vector.broadcast %cst_57 : f32 to vector<2x256xf32>
    %91 = arith.mulf %89, %90 : vector<2x256xf32>
    %cst_58 = arith.constant 0.959999978 : f32
    %92 = vector.broadcast %cst_58 : f32 to vector<2x256xf32>
    %93 = arith.addf %91, %92 : vector<2x256xf32>
    %c0_59 = arith.constant 0 : index
    %c0_60 = arith.constant 0 : index
    %94 = vector.load %arg8[%c0_59, %c0_60] : memref<2x256xf32, #tpu.memory_space<vmem>>, vector<2x256xf32>
    tpu.vector_store %arg8[%c0_59, %c0_60], %93 {strides = array<i32>} : memref<2x256xf32, #tpu.memory_space<vmem>>, vector<2x256xf32>,
    return
  }
  func.func @transform_0(%arg0: i32) -> (i32, i32) {
    %c0_i32 = arith.constant 0 : i32
    %c0_i32_0 = arith.constant 0 : i32
    return %arg0, %c0_i32 : i32, i32
  }
  func.func @transform_1(%arg0: i32) -> (i32, i32) {
    %c0_i32 = arith.constant 0 : i32
    %c0_i32_0 = arith.constant 0 : i32
    %c0_i32_1 = arith.constant 0 : i32
    return %c0_i32, %c0_i32_0 : i32, i32
  }
  func.func @transform_2(%arg0: i32) -> (i32, i32, i32) {
    %c0_i32 = arith.constant 0 : i32
    %c0_i32_0 = arith.constant 0 : i32
    %c0_i32_1 = arith.constant 0 : i32
    %c0_i32_2 = arith.constant 0 : i32
    return %c0_i32, %c0_i32_0, %c0_i32_1 : i32, i32, i32
  }
  func.func @transform_3(%arg0: i32) -> (i32, i32) {
    %c0_i32 = arith.constant 0 : i32
    %c0_i32_0 = arith.constant 0 : i32
    %c0_i32_1 = arith.constant 0 : i32
    return %c0_i32, %c0_i32_0 : i32, i32
  }
  func.func @transform_4(%arg0: i32) -> (i32, i32) {
    %c0_i32 = arith.constant 0 : i32
    %c0_i32_0 = arith.constant 0 : i32
    %c0_i32_1 = arith.constant 0 : i32
    return %c0_i32, %c0_i32_0 : i32, i32
  }
  func.func @transform_5(%arg0: i32) -> (i32, i32) {
    %c0_i32 = arith.constant 0 : i32
    %c0_i32_0 = arith.constant 0 : i32
    %c0_i32_1 = arith.constant 0 : i32
    return %c0_i32, %c0_i32_0 : i32, i32
  }
  func.func @transform_6(%arg0: i32) -> (i32, i32) {
    %c0_i32 = arith.constant 0 : i32
    %c0_i32_0 = arith.constant 0 : i32
    %c0_i32_1 = arith.constant 0 : i32
    return %c0_i32, %c0_i32_0 : i32, i32
  }
  func.func @transform_7(%arg0: i32) -> (i32, i32) {
    %c0_i32 = arith.constant 0 : i32
    %c0_i32_0 = arith.constant 0 : i32
    return %arg0, %c0_i32 : i32, i32
  }
}

</mosaic_0001>

<llo_original>
// kernel: forward.1
$region0: #{forward.1}
  #allocation0 [shape = 'u32[]', space=smem, size = 0x4, offset = 0x4, fixed_abs, tag = 'smem constant byte address 0x4 - core index']
  #allocation1 [shape = 'u32[144,128]{1,0:T(1,128)}', space=vmem, size = 0x12000, scoped, tag = 'internal scratch']
  %s0 = inlined_call_operand.vmem [shape: f32[2,256], index: 0, kind: input, shape index: {}]
  %s1 = inlined_call_operand.vmem [shape: bf16[256,32], index: 1, kind: input, shape index: {}]
  %s2 = inlined_call_operand.vmem [shape: bf16[6,32,32], index: 2, kind: input, shape index: {}]
  %s3 = inlined_call_operand.vmem [shape: bf16[32,8], index: 3, kind: input, shape index: {}]
  %s4 = inlined_call_operand.vmem [shape: bf16[8,32], index: 4, kind: input, shape index: {}]
  %s5 = inlined_call_operand.vmem [shape: bf16[32,256], index: 5, kind: input, shape index: {}]
  %s6 = inlined_call_operand.vmem [shape: f32[10,256], index: 6, kind: input, shape index: {}]
  %s7 = inlined_call_operand.hbm [shape: f32[2,256], index: 7, kind: output, shape index: {}]
  %s8 = sld [smem:[#allocation0]]
  $region38: #{forward.1} parent=0
    _
  %s10 = ssub.s32 1, %s8
  %s11 = scalar_select 0, %s10, %s8
  $region1: #{forward.1} parent=0
    #allocation2 [shape = 'u8[2048]{0}', space=vmem, size = 0x800, scoped, tag = 'output window, operand 0, single buffered']
    #allocation3 [shape = 's32[1]{0}', space=sflag, size = 0x4, scoped, tag = 'scoped memory for forward.1']
    %12 = vsyncpa [#allocation3], 0
    // Predicated region
    $region2: #{forward.1} parent=1 // pred_check
      _
    $region3: #{forward.1} parent=1 // pred_check_branch
      %14 = sbr.rel (0) target = $region5
    $region4: #{forward.1} parent=1 // pred_region
      _
    $region5: #{forward.1} parent=1 // pred_fallthru
      _
    // Predicated region
    $region6: #{forward.1} parent=1 // pred_check
      _
    $region7: #{forward.1} parent=1 // pred_check_branch
      %16 = sbr.rel (0) target = $region9
    $region8: #{forward.1} parent=1 // pred_region
      _
    $region9: #{forward.1} parent=1 // pred_fallthru
      _
    // Predicated region
    $region10: #{forward.1} parent=1 // pred_check
      _
    $region11: #{forward.1} parent=1 // pred_check_branch
      %18 = sbr.rel (0) target = $region13
    $region12: #{forward.1} parent=1 // pred_region
      _
    $region13: #{forward.1} parent=1 // pred_fallthru
      _
    // Predicated region
    $region14: #{forward.1} parent=1 // pred_check
      _
    $region15: #{forward.1} parent=1 // pred_check_branch
      %20 = sbr.rel (0) target = $region17
    $region16: #{forward.1} parent=1 // pred_region
      _
    $region17: #{forward.1} parent=1 // pred_fallthru
      _
    // Predicated region
    $region18: #{forward.1} parent=1 // pred_check
      _
    $region19: #{forward.1} parent=1 // pred_check_branch
      %22 = sbr.rel (0) target = $region21
    $region20: #{forward.1} parent=1 // pred_region
      _
    $region21: #{forward.1} parent=1 // pred_fallthru
      _
    // Predicated region
    $region22: #{forward.1} parent=1 // pred_check
      _
    $region23: #{forward.1} parent=1 // pred_check_branch
      %24 = sbr.rel (0) target = $region25
    $region24: #{forward.1} parent=1 // pred_region
      _
    $region25: #{forward.1} parent=1 // pred_fallthru
      _
    // Predicated region
    $region26: #{forward.1} parent=1 // pred_check
      _
    $region27: #{forward.1} parent=1 // pred_check_branch
      %26 = sbr.rel (0) target = $region29
    $region28: #{forward.1} parent=1 // pred_region
      _
    $region29: #{forward.1} parent=1 // pred_fallthru
      _
    %v28 = vld [vmem:[%s0] sm:$0xf]
    %v31 = vunpack.c.l.s4 1983009808
    %v32 = vunpack.c.0.s8 %v31
    %v33 = vlaneseq
    %v34 = vshrl.u32 %v33, 7
    %v35 = vsub.s32 %v32, %v34
    %v36 = vrot.slane %v28, %v35
    %v37 = vcombine.high %v36, %v36
    %v40 = vpack.c.bf16 %v36, %v36
    %v41 = vpack.c.bf16 %v37, %v37
    %v42 = vld [vmem:[%s1] sm:$0xf]
    %v43 = vld [vmem:[%s1 + $0x4] sm:$0xf]
    %v44 = vld [vmem:[%s1 + $0x8] sm:$0xf]
    %v45 = vld [vmem:[%s1 + $0xc] sm:$0xf]
    %v46 = vld [vmem:[%s1 + $0x10] sm:$0xf]
    %v47 = vld [vmem:[%s1 + $0x14] sm:$0xf]
    %v48 = vld [vmem:[%s1 + $0x18] sm:$0xf]
    %v49 = vld [vmem:[%s1 + $0x1c] sm:$0xf]
    %v50 = vld [vmem:[%s1 + $0x20] sm:$0xf]
    %v51 = vld [vmem:[%s1 + $0x24] sm:$0xf]
    %v52 = vld [vmem:[%s1 + $0x28] sm:$0xf]
    %v53 = vld [vmem:[%s1 + $0x2c] sm:$0xf]
    %v54 = vld [vmem:[%s1 + $0x30] sm:$0xf]
    %v55 = vld [vmem:[%s1 + $0x34] sm:$0xf]
    %v56 = vld [vmem:[%s1 + $0x38] sm:$0xf]
    %v57 = vld [vmem:[%s1 + $0x3c] sm:$0xf]
    %v58 = vld [vmem:[%s1 + $0x40] sm:$0xf]
    %v59 = vld [vmem:[%s1 + $0x44] sm:$0xf]
    %v60 = vld [vmem:[%s1 + $0x48] sm:$0xf]
    %v61 = vld [vmem:[%s1 + $0x4c] sm:$0xf]
    %v62 = vld [vmem:[%s1 + $0x50] sm:$0xf]
    %v63 = vld [vmem:[%s1 + $0x54] sm:$0xf]
    %v64 = vld [vmem:[%s1 + $0x58] sm:$0xf]
    %v65 = vld [vmem:[%s1 + $0x5c] sm:$0xf]
    %v66 = vld [vmem:[%s1 + $0x60] sm:$0xf]
    %v67 = vld [vmem:[%s1 + $0x64] sm:$0xf]
    %v68 = vld [vmem:[%s1 + $0x68] sm:$0xf]
    %v69 = vld [vmem:[%s1 + $0x6c] sm:$0xf]
    %v70 = vld [vmem:[%s1 + $0x70] sm:$0xf]
    %v71 = vld [vmem:[%s1 + $0x74] sm:$0xf]
    %v72 = vld [vmem:[%s1 + $0x78] sm:$0xf]
    %v73 = vld [vmem:[%s1 + $0x7c] sm:$0xf]
    %v74 = vld [vmem:[%s6] ss:$0 sm:$0xff]
    %v107 = vunpack.c.l.b16 %v42
    %v108 = vunpack.c.l.b16 %v43
    %v109 = vunpack.c.l.b16 %v44
    %v110 = vunpack.c.l.b16 %v45
    %v111 = vunpack.c.l.b16 %v46
    %v112 = vunpack.c.l.b16 %v47
    %v113 = vunpack.c.l.b16 %v48
    %v114 = vunpack.c.l.b16 %v49
    %v115 = vunpack.c.l.b16 %v50
    %v116 = vunpack.c.l.b16 %v51
    %v117 = vunpack.c.l.b16 %v52
    %v118 = vunpack.c.l.b16 %v53
    %v119 = vunpack.c.l.b16 %v54
    %v120 = vunpack.c.l.b16 %v55
    %v121 = vunpack.c.l.b16 %v56
    %v122 = vunpack.c.l.b16 %v57
    %v123 = vunpack.c.l.b16 %v58
    %v124 = vunpack.c.l.b16 %v59
    %v125 = vunpack.c.l.b16 %v60
    %v126 = vunpack.c.l.b16 %v61
    %v127 = vunpack.c.l.b16 %v62
    %v128 = vunpack.c.l.b16 %v63
    %v129 = vunpack.c.l.b16 %v64
    %v130 = vunpack.c.l.b16 %v65
    %v131 = vunpack.c.l.b16 %v66
    %v132 = vunpack.c.l.b16 %v67
    %v133 = vunpack.c.l.b16 %v68
    %v134 = vunpack.c.l.b16 %v69
    %v135 = vunpack.c.l.b16 %v70
    %v136 = vunpack.c.l.b16 %v71
    %v137 = vunpack.c.l.b16 %v72
    %v138 = vunpack.c.l.b16 %v73
    %v139 = vpack.c.b16 %v108, %v107
    %v140 = vpack.c.b16 %v110, %v109
    %v141 = vpack.c.b16 %v112, %v111
    %v142 = vpack.c.b16 %v114, %v113
    %v143 = vpack.c.b16 %v116, %v115
    %v144 = vpack.c.b16 %v118, %v117
    %v145 = vpack.c.b16 %v120, %v119
    %v146 = vpack.c.b16 %v122, %v121
    %v147 = vpack.c.b16 %v124, %v123
    %v148 = vpack.c.b16 %v126, %v125
    %v149 = vpack.c.b16 %v128, %v127
    %v150 = vpack.c.b16 %v130, %v129
    %v151 = vpack.c.b16 %v132, %v131
    %v152 = vpack.c.b16 %v134, %v133
    %v153 = vpack.c.b16 %v136, %v135
    %v154 = vpack.c.b16 %v138, %v137
    %171 = vmatprep.subr.bf16.mxu0 0
    %172 = vmatpush1.bf16.msra.mxu0 %v146
    %173 = vmatprep.subr.bf16.mxu0 0
    %174 = vmatpush1.bf16.msra.mxu0 %v145
    %175 = vmatprep.subr.bf16.mxu0 0
    %176 = vmatpush1.bf16.msra.mxu0 %v144
    %177 = vmatprep.subr.bf16.mxu0 0
    %178 = vmatpush1.bf16.msra.mxu0 %v143
    %179 = vmatprep.subr.bf16.mxu0 0
    %180 = vmatpush1.bf16.msra.mxu0 %v142
    %181 = vmatprep.subr.bf16.mxu0 0
    %182 = vmatpush1.bf16.msra.mxu0 %v141
    %183 = vmatprep.subr.bf16.mxu0 0
    %184 = vmatpush1.bf16.msra.mxu0 %v140
    %185 = vmatprep.subr.bf16.mxu0 0
    %186 = vmatpush1.bf16.msra.mxu0 %v139
    %187 = vmatprep.subr.bf16.mxu0 0
    %188 = vmatpush2.bf16.msra.mxu0 %v154
    %189 = vmatprep.subr.bf16.mxu0 0
    %190 = vmatpush2.bf16.msra.mxu0 %v153
    %191 = vmatprep.subr.bf16.mxu0 0
    %192 = vmatpush2.bf16.msra.mxu0 %v152
    %193 = vmatprep.subr.bf16.mxu0 0
    %194 = vmatpush2.bf16.msra.mxu0 %v151
    %195 = vmatprep.subr.bf16.mxu0 0
    %196 = vmatpush2.bf16.msra.mxu0 %v150
    %197 = vmatprep.subr.bf16.mxu0 0
    %198 = vmatpush2.bf16.msra.mxu0 %v149
    %199 = vmatprep.subr.bf16.mxu0 0
    %200 = vmatpush2.bf16.msra.mxu0 %v148
    %201 = vmatprep.subr.bf16.mxu0 0
    %202 = vmatpush2.bf16.msra.mxu0 %v147
    %203 = vmatprep.mubr.bf16.mxu0 %v41
    %204 = vmatmul.mubr.bf16.gmra.mxu0 %v40
    %v205 = vpop.f32.mrf.mxu0
    %v206 = vadd.f32 %v74, %v205
    %v207 = vpop.f32.mrf.mxu0
    %v208 = vpop.f32.mrf.mxu0
    %v209 = vpop.f32.mrf.mxu0
    %210 = vdwg.mxu0
    %v211 = vmax.f32 %v206, 0.0
    %v212 = vpack.c.bf16 %v211, %v211
    %v213 = vld [vmem:[%s2] sm:$0xf]
    %v214 = vld [vmem:[%s2 + $0x4] sm:$0xf]
    %v215 = vld [vmem:[%s2 + $0x8] sm:$0xf]
    %v216 = vld [vmem:[%s2 + $0xc] sm:$0xf]
    %v217 = vld [vmem:[%s6 + $0x1] ss:$0 sm:$0xff]
    %v222 = vunpack.c.l.b16 %v213
    %v223 = vunpack.c.l.b16 %v214
    %v224 = vunpack.c.l.b16 %v215
    %v225 = vunpack.c.l.b16 %v216
    %v226 = vpack.c.b16 %v223, %v222
    %v227 = vpack.c.b16 %v225, %v224
    %vm230 = vcmask 261120
    %v232 = vsel %vm230, %v212, 0
    %234 = vmatprep.subr.bf16.mxu0 0
    %235 = vmatpush1.bf16.msra.mxu0 0
    %236 = vmatprep.subr.bf16.mxu0 0
    %237 = vmatpush1.bf16.msra.mxu0 0
    %238 = vmatprep.subr.bf16.mxu0 0
    %239 = vmatpush1.bf16.msra.mxu0 0
    %240 = vmatprep.subr.bf16.mxu0 0
    %241 = vmatpush1.bf16.msra.mxu0 0
    %242 = vmatprep.subr.bf16.mxu0 0
    %243 = vmatpush1.bf16.msra.mxu0 0
    %244 = vmatprep.subr.bf16.mxu0 0
    %245 = vmatpush1.bf16.msra.mxu0 0
    %246 = vmatprep.subr.bf16.mxu0 0
    %247 = vmatpush1.bf16.msra.mxu0 %v227
    %248 = vmatprep.subr.bf16.mxu0 0
    %249 = vmatpush1.bf16.msra.mxu0 %v226
    %250 = vmatprep.subr.bf16.mxu0 0
    %251 = vmatpush2.bf16.msra.mxu0 0
    %252 = vmatprep.subr.bf16.mxu0 0
    %253 = vmatpush2.bf16.msra.mxu0 0
    %254 = vmatprep.subr.bf16.mxu0 0
    %255 = vmatpush2.bf16.msra.mxu0 0
    %256 = vmatprep.subr.bf16.mxu0 0
    %257 = vmatpush2.bf16.msra.mxu0 0
    %258 = vmatprep.subr.bf16.mxu0 0
    %259 = vmatpush2.bf16.msra.mxu0 0
    %260 = vmatprep.subr.bf16.mxu0 0
    %261 = vmatpush2.bf16.msra.mxu0 0
    %262 = vmatprep.subr.bf16.mxu0 0
    %263 = vmatpush2.bf16.msra.mxu0 0
    %264 = vmatprep.subr.bf16.mxu0 0
    %265 = vmatpush2.bf16.msra.mxu0 0
    %266 = vmatprep.mubr.bf16.mxu0 0
    %267 = vmatmul.mubr.bf16.gmra.mxu0 %v232
    %v268 = vpop.f32.mrf.mxu0
    %v269 = vadd.f32 %v217, %v268
    %v270 = vpop.f32.mrf.mxu0
    %v271 = vpop.f32.mrf.mxu0
    %v272 = vpop.f32.mrf.mxu0
    %273 = vdwg.mxu0
    %v274 = vmax.f32 %v269, 0.0
    %v275 = vpack.c.bf16 %v274, %v274
    %s276 = scalar_lea.vmem %s2, 16
    %v277 = vld [vmem:[%s276] sm:$0xf]
    %v278 = vld [vmem:[%s276 + $0x4] sm:$0xf]
    %v279 = vld [vmem:[%s276 + $0x8] sm:$0xf]
    %v280 = vld [vmem:[%s276 + $0xc] sm:$0xf]
    %v281 = vld [vmem:[%s6 + $0x2] ss:$0 sm:$0xff]
    %v286 = vunpack.c.l.b16 %v277
    %v287 = vunpack.c.l.b16 %v278
    %v288 = vunpack.c.l.b16 %v279
    %v289 = vunpack.c.l.b16 %v280
    %v290 = vpack.c.b16 %v287, %v286
    %v291 = vpack.c.b16 %v289, %v288
    %v295 = vsel %vm230, %v275, 0
    %297 = vmatprep.subr.bf16.mxu0 0
    %298 = vmatpush1.bf16.msra.mxu0 0
    %299 = vmatprep.subr.bf16.mxu0 0
    %300 = vmatpush1.bf16.msra.mxu0 0
    %301 = vmatprep.subr.bf16.mxu0 0
    %302 = vmatpush1.bf16.msra.mxu0 0
    %303 = vmatprep.subr.bf16.mxu0 0
    %304 = vmatpush1.bf16.msra.mxu0 0
    %305 = vmatprep.subr.bf16.mxu0 0
    %306 = vmatpush1.bf16.msra.mxu0 0
    %307 = vmatprep.subr.bf16.mxu0 0
    %308 = vmatpush1.bf16.msra.mxu0 0
    %309 = vmatprep.subr.bf16.mxu0 0
    %310 = vmatpush1.bf16.msra.mxu0 %v291
    %311 = vmatprep.subr.bf16.mxu0 0
    %312 = vmatpush1.bf16.msra.mxu0 %v290
    %313 = vmatprep.subr.bf16.mxu0 0
    %314 = vmatpush2.bf16.msra.mxu0 0
    %315 = vmatprep.subr.bf16.mxu0 0
    %316 = vmatpush2.bf16.msra.mxu0 0
    %317 = vmatprep.subr.bf16.mxu0 0
    %318 = vmatpush2.bf16.msra.mxu0 0
    %319 = vmatprep.subr.bf16.mxu0 0
    %320 = vmatpush2.bf16.msra.mxu0 0
    %321 = vmatprep.subr.bf16.mxu0 0
    %322 = vmatpush2.bf16.msra.mxu0 0
    %323 = vmatprep.subr.bf16.mxu0 0
    %324 = vmatpush2.bf16.msra.mxu0 0
    %325 = vmatprep.subr.bf16.mxu0 0
    %326 = vmatpush2.bf16.msra.mxu0 0
    %327 = vmatprep.subr.bf16.mxu0 0
    %328 = vmatpush2.bf16.msra.mxu0 0
    %329 = vmatprep.mubr.bf16.mxu0 0
    %330 = vmatmul.mubr.bf16.gmra.mxu0 %v295
    %v331 = vpop.f32.mrf.mxu0
    %v332 = vadd.f32 %v281, %v331
    %v333 = vpop.f32.mrf.mxu0
    %v334 = vpop.f32.mrf.mxu0
    %v335 = vpop.f32.mrf.mxu0
    %336 = vdwg.mxu0
    %v337 = vmax.f32 %v332, 0.0
    %v338 = vpack.c.bf16 %v337, %v337
    %s339 = scalar_lea.vmem %s2, 32
    %v340 = vld [vmem:[%s339] sm:$0xf]
    %v341 = vld [vmem:[%s339 + $0x4] sm:$0xf]
    %v342 = vld [vmem:[%s339 + $0x8] sm:$0xf]
    %v343 = vld [vmem:[%s339 + $0xc] sm:$0xf]
    %v344 = vld [vmem:[%s6 + $0x3] ss:$0 sm:$0xff]
    %v349 = vunpack.c.l.b16 %v340
    %v350 = vunpack.c.l.b16 %v341
    %v351 = vunpack.c.l.b16 %v342
    %v352 = vunpack.c.l.b16 %v343
    %v353 = vpack.c.b16 %v350, %v349
    %v354 = vpack.c.b16 %v352, %v351
    %v358 = vsel %vm230, %v338, 0
    %360 = vmatprep.subr.bf16.mxu0 0
    %361 = vmatpush1.bf16.msra.mxu0 0
    %362 = vmatprep.subr.bf16.mxu0 0
    %363 = vmatpush1.bf16.msra.mxu0 0
    %364 = vmatprep.subr.bf16.mxu0 0
    %365 = vmatpush1.bf16.msra.mxu0 0
    %366 = vmatprep.subr.bf16.mxu0 0
    %367 = vmatpush1.bf16.msra.mxu0 0
    %368 = vmatprep.subr.bf16.mxu0 0
    %369 = vmatpush1.bf16.msra.mxu0 0
    %370 = vmatprep.subr.bf16.mxu0 0
    %371 = vmatpush1.bf16.msra.mxu0 0
    %372 = vmatprep.subr.bf16.mxu0 0
    %373 = vmatpush1.bf16.msra.mxu0 %v354
    %374 = vmatprep.subr.bf16.mxu0 0
    %375 = vmatpush1.bf16.msra.mxu0 %v353
    %376 = vmatprep.subr.bf16.mxu0 0
    %377 = vmatpush2.bf16.msra.mxu0 0
    %378 = vmatprep.subr.bf16.mxu0 0
    %379 = vmatpush2.bf16.msra.mxu0 0
    %380 = vmatprep.subr.bf16.mxu0 0
    %381 = vmatpush2.bf16.msra.mxu0 0
    %382 = vmatprep.subr.bf16.mxu0 0
    %383 = vmatpush2.bf16.msra.mxu0 0
    %384 = vmatprep.subr.bf16.mxu0 0
    %385 = vmatpush2.bf16.msra.mxu0 0
    %386 = vmatprep.subr.bf16.mxu0 0
    %387 = vmatpush2.bf16.msra.mxu0 0
    %388 = vmatprep.subr.bf16.mxu0 0
    %389 = vmatpush2.bf16.msra.mxu0 0
    %390 = vmatprep.subr.bf16.mxu0 0
    %391 = vmatpush2.bf16.msra.mxu0 0
    %392 = vmatprep.mubr.bf16.mxu0 0
    %393 = vmatmul.mubr.bf16.gmra.mxu0 %v358
    %v394 = vpop.f32.mrf.mxu0
    %v395 = vadd.f32 %v344, %v394
    %v396 = vpop.f32.mrf.mxu0
    %v397 = vpop.f32.mrf.mxu0
    %v398 = vpop.f32.mrf.mxu0
    %399 = vdwg.mxu0
    %v400 = vmax.f32 %v395, 0.0
    %v401 = vpack.c.bf16 %v400, %v400
    %v402 = vld [vmem:[%s3] sm:$0xf]
    %v403 = vld [vmem:[%s3 + $0x4] sm:$0xf]
    %v404 = vld [vmem:[%s3 + $0x8] sm:$0xf]
    %v405 = vld [vmem:[%s3 + $0xc] sm:$0xf]
    %v406 = vld [vmem:[%s6 + $0x4] ss:$0 sm:$0xff]
    %v411 = vunpack.c.l.b16 %v402
    %v412 = vunpack.c.l.b16 %v403
    %v413 = vunpack.c.l.b16 %v404
    %v414 = vunpack.c.l.b16 %v405
    %v415 = vpack.c.b16 %v412, %v411
    %v416 = vpack.c.b16 %v414, %v413
    %v420 = vsel %vm230, %v401, 0
    %422 = vmatprep.subr.bf16.mxu0 0
    %423 = vmatpush1.bf16.msra.mxu0 0
    %424 = vmatprep.subr.bf16.mxu0 0
    %425 = vmatpush1.bf16.msra.mxu0 0
    %426 = vmatprep.subr.bf16.mxu0 0
    %427 = vmatpush1.bf16.msra.mxu0 0
    %428 = vmatprep.subr.bf16.mxu0 0
    %429 = vmatpush1.bf16.msra.mxu0 0
    %430 = vmatprep.subr.bf16.mxu0 0
    %431 = vmatpush1.bf16.msra.mxu0 0
    %432 = vmatprep.subr.bf16.mxu0 0
    %433 = vmatpush1.bf16.msra.mxu0 0
    %434 = vmatprep.subr.bf16.mxu0 0
    %435 = vmatpush1.bf16.msra.mxu0 %v416
    %436 = vmatprep.subr.bf16.mxu0 0
    %437 = vmatpush1.bf16.msra.mxu0 %v415
    %438 = vmatprep.subr.bf16.mxu0 0
    %439 = vmatpush2.bf16.msra.mxu0 0
    %440 = vmatprep.subr.bf16.mxu0 0
    %441 = vmatpush2.bf16.msra.mxu0 0
    %442 = vmatprep.subr.bf16.mxu0 0
    %443 = vmatpush2.bf16.msra.mxu0 0
    %444 = vmatprep.subr.bf16.mxu0 0
    %445 = vmatpush2.bf16.msra.mxu0 0
    %446 = vmatprep.subr.bf16.mxu0 0
    %447 = vmatpush2.bf16.msra.mxu0 0
    %448 = vmatprep.subr.bf16.mxu0 0
    %449 = vmatpush2.bf16.msra.mxu0 0
    %450 = vmatprep.subr.bf16.mxu0 0
    %451 = vmatpush2.bf16.msra.mxu0 0
    %452 = vmatprep.subr.bf16.mxu0 0
    %453 = vmatpush2.bf16.msra.mxu0 0
    %454 = vmatprep.mubr.bf16.mxu0 0
    %455 = vmatmul.mubr.bf16.gmra.mxu0 %v420
    %v456 = vpop.f32.mrf.mxu0
    %v457 = vadd.f32 %v406, %v456
    %v458 = vpop.f32.mrf.mxu0
    %v459 = vpop.f32.mrf.mxu0
    %v460 = vpop.f32.mrf.mxu0
    %461 = vdwg.mxu0
    %v462 = vmax.f32 %v457, 0.0
    %v463 = vpack.c.bf16 %v462, %v462
    %v464 = vld [vmem:[%s4] sm:$0xf]
    %v465 = vld [vmem:[%s6 + $0x5] ss:$0 sm:$0xff]
    %vm466 = vcmask 64512
    %v468 = vsel %vm466, %v463, 0
    %vm470 = vcmask 1043456
    %v472 = vsel %vm470, %v464, 0
    %474 = vmatprep.subr.bf16.mxu0 0
    %475 = vmatpush1.bf16.msra.mxu0 0
    %476 = vmatprep.subr.bf16.mxu0 0
    %477 = vmatpush1.bf16.msra.mxu0 0
    %478 = vmatprep.subr.bf16.mxu0 0
    %479 = vmatpush1.bf16.msra.mxu0 0
    %480 = vmatprep.subr.bf16.mxu0 0
    %481 = vmatpush1.bf16.msra.mxu0 0
    %482 = vmatprep.subr.bf16.mxu0 0
    %483 = vmatpush1.bf16.msra.mxu0 0
    %484 = vmatprep.subr.bf16.mxu0 0
    %485 = vmatpush1.bf16.msra.mxu0 0
    %486 = vmatprep.subr.bf16.mxu0 0
    %487 = vmatpush1.bf16.msra.mxu0 0
    %488 = vmatprep.subr.bf16.mxu0 0
    %489 = vmatpush1.bf16.msra.mxu0 %v472
    %490 = vmatprep.subr.bf16.mxu0 0
    %491 = vmatpush2.bf16.msra.mxu0 0
    %492 = vmatprep.subr.bf16.mxu0 0
    %493 = vmatpush2.bf16.msra.mxu0 0
    %494 = vmatprep.subr.bf16.mxu0 0
    %495 = vmatpush2.bf16.msra.mxu0 0
    %496 = vmatprep.subr.bf16.mxu0 0
    %497 = vmatpush2.bf16.msra.mxu0 0
    %498 = vmatprep.subr.bf16.mxu0 0
    %499 = vmatpush2.bf16.msra.mxu0 0
    %500 = vmatprep.subr.bf16.mxu0 0
    %501 = vmatpush2.bf16.msra.mxu0 0
    %502 = vmatprep.subr.bf16.mxu0 0
    %503 = vmatpush2.bf16.msra.mxu0 0
    %504 = vmatprep.subr.bf16.mxu0 0
    %505 = vmatpush2.bf16.msra.mxu0 0
    %506 = vmatprep.mubr.bf16.mxu0 0
    %507 = vmatmul.mubr.bf16.gmra.mxu0 %v468
    %v508 = vpop.f32.mrf.mxu0
    %v509 = vadd.f32 %v465, %v508
    %v510 = vpop.f32.mrf.mxu0
    %v511 = vpop.f32.mrf.mxu0
    %v512 = vpop.f32.mrf.mxu0
    %513 = vdwg.mxu0
    %v514 = vmax.f32 %v509, 0.0
    %v515 = vpack.c.bf16 %v514, %v514
    %s516 = scalar_lea.vmem %s2, 48
    %v517 = vld [vmem:[%s516] sm:$0xf]
    %v518 = vld [vmem:[%s516 + $0x4] sm:$0xf]
    %v519 = vld [vmem:[%s516 + $0x8] sm:$0xf]
    %v520 = vld [vmem:[%s516 + $0xc] sm:$0xf]
    %v521 = vld [vmem:[%s6 + $0x6] ss:$0 sm:$0xff]
    %v526 = vunpack.c.l.b16 %v517
    %v527 = vunpack.c.l.b16 %v518
    %v528 = vunpack.c.l.b16 %v519
    %v529 = vunpack.c.l.b16 %v520
    %v530 = vpack.c.b16 %v527, %v526
    %v531 = vpack.c.b16 %v529, %v528
    %v535 = vsel %vm230, %v515, 0
    %537 = vmatprep.subr.bf16.mxu0 0
    %538 = vmatpush1.bf16.msra.mxu0 0
    %539 = vmatprep.subr.bf16.mxu0 0
    %540 = vmatpush1.bf16.msra.mxu0 0
    %541 = vmatprep.subr.bf16.mxu0 0
    %542 = vmatpush1.bf16.msra.mxu0 0
    %543 = vmatprep.subr.bf16.mxu0 0
    %544 = vmatpush1.bf16.msra.mxu0 0
    %545 = vmatprep.subr.bf16.mxu0 0
    %546 = vmatpush1.bf16.msra.mxu0 0
    %547 = vmatprep.subr.bf16.mxu0 0
    %548 = vmatpush1.bf16.msra.mxu0 0
    %549 = vmatprep.subr.bf16.mxu0 0
    %550 = vmatpush1.bf16.msra.mxu0 %v531
    %551 = vmatprep.subr.bf16.mxu0 0
    %552 = vmatpush1.bf16.msra.mxu0 %v530
    %553 = vmatprep.subr.bf16.mxu0 0
    %554 = vmatpush2.bf16.msra.mxu0 0
    %555 = vmatprep.subr.bf16.mxu0 0
    %556 = vmatpush2.bf16.msra.mxu0 0
    %557 = vmatprep.subr.bf16.mxu0 0
    %558 = vmatpush2.bf16.msra.mxu0 0
    %559 = vmatprep.subr.bf16.mxu0 0
    %560 = vmatpush2.bf16.msra.mxu0 0
    %561 = vmatprep.subr.bf16.mxu0 0
    %562 = vmatpush2.bf16.msra.mxu0 0
    %563 = vmatprep.subr.bf16.mxu0 0
    %564 = vmatpush2.bf16.msra.mxu0 0
    %565 = vmatprep.subr.bf16.mxu0 0
    %566 = vmatpush2.bf16.msra.mxu0 0
    %567 = vmatprep.subr.bf16.mxu0 0
    %568 = vmatpush2.bf16.msra.mxu0 0
    %569 = vmatprep.mubr.bf16.mxu0 0
    %570 = vmatmul.mubr.bf16.gmra.mxu0 %v535
    %v571 = vpop.f32.mrf.mxu0
    %v572 = vadd.f32 %v521, %v571
    %v573 = vpop.f32.mrf.mxu0
    %v574 = vpop.f32.mrf.mxu0
    %v575 = vpop.f32.mrf.mxu0
    %576 = vdwg.mxu0
    %v577 = vmax.f32 %v572, 0.0
    %v578 = vpack.c.bf16 %v577, %v577
    %s579 = scalar_lea.vmem %s2, 64
    %v580 = vld [vmem:[%s579] sm:$0xf]
    %v581 = vld [vmem:[%s579 + $0x4] sm:$0xf]
    %v582 = vld [vmem:[%s579 + $0x8] sm:$0xf]
    %v583 = vld [vmem:[%s579 + $0xc] sm:$0xf]
    %v584 = vld [vmem:[%s6 + $0x7] ss:$0 sm:$0xff]
    %v589 = vunpack.c.l.b16 %v580
    %v590 = vunpack.c.l.b16 %v581
    %v591 = vunpack.c.l.b16 %v582
    %v592 = vunpack.c.l.b16 %v583
    %v593 = vpack.c.b16 %v590, %v589
    %v594 = vpack.c.b16 %v592, %v591
    %v598 = vsel %vm230, %v578, 0
    %600 = vmatprep.subr.bf16.mxu0 0
    %601 = vmatpush1.bf16.msra.mxu0 0
    %602 = vmatprep.subr.bf16.mxu0 0
    %603 = vmatpush1.bf16.msra.mxu0 0
    %604 = vmatprep.subr.bf16.mxu0 0
    %605 = vmatpush1.bf16.msra.mxu0 0
    %606 = vmatprep.subr.bf16.mxu0 0
    %607 = vmatpush1.bf16.msra.mxu0 0
    %608 = vmatprep.subr.bf16.mxu0 0
    %609 = vmatpush1.bf16.msra.mxu0 0
    %610 = vmatprep.subr.bf16.mxu0 0
    %611 = vmatpush1.bf16.msra.mxu0 0
    %612 = vmatprep.subr.bf16.mxu0 0
    %613 = vmatpush1.bf16.msra.mxu0 %v594
    %614 = vmatprep.subr.bf16.mxu0 0
    %615 = vmatpush1.bf16.msra.mxu0 %v593
    %616 = vmatprep.subr.bf16.mxu0 0
    %617 = vmatpush2.bf16.msra.mxu0 0
    %618 = vmatprep.subr.bf16.mxu0 0
    %619 = vmatpush2.bf16.msra.mxu0 0
    %620 = vmatprep.subr.bf16.mxu0 0
    %621 = vmatpush2.bf16.msra.mxu0 0
    %622 = vmatprep.subr.bf16.mxu0 0
    %623 = vmatpush2.bf16.msra.mxu0 0
    %624 = vmatprep.subr.bf16.mxu0 0
    %625 = vmatpush2.bf16.msra.mxu0 0
    %626 = vmatprep.subr.bf16.mxu0 0
    %627 = vmatpush2.bf16.msra.mxu0 0
    %628 = vmatprep.subr.bf16.mxu0 0
    %629 = vmatpush2.bf16.msra.mxu0 0
    %630 = vmatprep.subr.bf16.mxu0 0
    %631 = vmatpush2.bf16.msra.mxu0 0
    %632 = vmatprep.mubr.bf16.mxu0 0
    %633 = vmatmul.mubr.bf16.gmra.mxu0 %v598
    %v634 = vpop.f32.mrf.mxu0
    %v635 = vadd.f32 %v584, %v634
    %v636 = vpop.f32.mrf.mxu0
    %v637 = vpop.f32.mrf.mxu0
    %v638 = vpop.f32.mrf.mxu0
    %639 = vdwg.mxu0
    %v640 = vmax.f32 %v635, 0.0
    %v641 = vpack.c.bf16 %v640, %v640
    %s642 = scalar_lea.vmem %s2, 80
    %v643 = vld [vmem:[%s642] sm:$0xf]
    %v644 = vld [vmem:[%s642 + $0x4] sm:$0xf]
    %v645 = vld [vmem:[%s642 + $0x8] sm:$0xf]
    %v646 = vld [vmem:[%s642 + $0xc] sm:$0xf]
    %v647 = vld [vmem:[%s6 + $0x10] ss:$0 sm:$0xff]
    %v652 = vunpack.c.l.b16 %v643
    %v653 = vunpack.c.l.b16 %v644
    %v654 = vunpack.c.l.b16 %v645
    %v655 = vunpack.c.l.b16 %v646
    %v656 = vpack.c.b16 %v653, %v652
    %v657 = vpack.c.b16 %v655, %v654
    %v661 = vsel %vm230, %v641, 0
    %663 = vmatprep.subr.bf16.mxu0 0
    %664 = vmatpush1.bf16.msra.mxu0 0
    %665 = vmatprep.subr.bf16.mxu0 0
    %666 = vmatpush1.bf16.msra.mxu0 0
    %667 = vmatprep.subr.bf16.mxu0 0
    %668 = vmatpush1.bf16.msra.mxu0 0
    %669 = vmatprep.subr.bf16.mxu0 0
    %670 = vmatpush1.bf16.msra.mxu0 0
    %671 = vmatprep.subr.bf16.mxu0 0
    %672 = vmatpush1.bf16.msra.mxu0 0
    %673 = vmatprep.subr.bf16.mxu0 0
    %674 = vmatpush1.bf16.msra.mxu0 0
    %675 = vmatprep.subr.bf16.mxu0 0
    %676 = vmatpush1.bf16.msra.mxu0 %v657
    %677 = vmatprep.subr.bf16.mxu0 0
    %678 = vmatpush1.bf16.msra.mxu0 %v656
    %679 = vmatprep.subr.bf16.mxu0 0
    %680 = vmatpush2.bf16.msra.mxu0 0
    %681 = vmatprep.subr.bf16.mxu0 0
    %682 = vmatpush2.bf16.msra.mxu0 0
    %683 = vmatprep.subr.bf16.mxu0 0
    %684 = vmatpush2.bf16.msra.mxu0 0
    %685 = vmatprep.subr.bf16.mxu0 0
    %686 = vmatpush2.bf16.msra.mxu0 0
    %687 = vmatprep.subr.bf16.mxu0 0
    %688 = vmatpush2.bf16.msra.mxu0 0
    %689 = vmatprep.subr.bf16.mxu0 0
    %690 = vmatpush2.bf16.msra.mxu0 0
    %691 = vmatprep.subr.bf16.mxu0 0
    %692 = vmatpush2.bf16.msra.mxu0 0
    %693 = vmatprep.subr.bf16.mxu0 0
    %694 = vmatpush2.bf16.msra.mxu0 0
    %695 = vmatprep.mubr.bf16.mxu0 0
    %696 = vmatmul.mubr.bf16.gmra.mxu0 %v661
    %v697 = vpop.f32.mrf.mxu0
    %v698 = vadd.f32 %v647, %v697
    %v699 = vpop.f32.mrf.mxu0
    %v700 = vpop.f32.mrf.mxu0
    %v701 = vpop.f32.mrf.mxu0
    %702 = vdwg.mxu0
    %v703 = vmax.f32 %v698, 0.0
    %v704 = vpack.c.bf16 %v703, %v703
    %v705 = vld [vmem:[%s5] sm:$0xff]
    %v706 = vld [vmem:[%s5 + $0x8] sm:$0xff]
    %v707 = vld [vmem:[%s5 + $0x10] sm:$0xff]
    %v708 = vld [vmem:[%s5 + $0x18] sm:$0xff]
    %s709 = scalar_lea.vmem %s6, 17
    %v710 = vld [vmem:[%s709] ss:$8 sm:$0x3]
    %v712 = vlaneseq
    %v713 = vshrl.u32 %v712, 7
    %v714 = vsub.s32 0, %v713
    %v715 = vrot.slane %v710, %v714
    %v716 = vlaneseq
    %v717 = vshrl.u32 %v716, 7
    %v718 = vsub.s32 1, %v717
    %v719 = vrot.slane %v710, %v718
    %v726 = vunpack.c.l.b16 %v705
    %v727 = vunpack.c.h.b16 %v705
    %v728 = vunpack.c.l.b16 %v706
    %v729 = vunpack.c.h.b16 %v706
    %v730 = vunpack.c.l.b16 %v707
    %v731 = vunpack.c.h.b16 %v707
    %v732 = vunpack.c.l.b16 %v708
    %v733 = vunpack.c.h.b16 %v708
    %v734 = vpack.c.b16 %v728, %v726
    %v735 = vpack.c.b16 %v729, %v727
    %v736 = vpack.c.b16 %v732, %v730
    %v737 = vpack.c.b16 %v733, %v731
    %v743 = vsel %vm230, %v704, 0
    %745 = vmatprep.subr.bf16.mxu0 0
    %746 = vmatpush1.bf16.msra.mxu0 0
    %747 = vmatprep.subr.bf16.mxu0 0
    %748 = vmatpush1.bf16.msra.mxu0 0
    %749 = vmatprep.subr.bf16.mxu0 0
    %750 = vmatpush1.bf16.msra.mxu0 0
    %751 = vmatprep.subr.bf16.mxu0 0
    %752 = vmatpush1.bf16.msra.mxu0 0
    %753 = vmatprep.subr.bf16.mxu0 0
    %754 = vmatpush1.bf16.msra.mxu0 0
    %755 = vmatprep.subr.bf16.mxu0 0
    %756 = vmatpush1.bf16.msra.mxu0 0
    %757 = vmatprep.subr.bf16.mxu0 %v737
    %758 = vmatpush1.bf16.msra.mxu0 %v736
    %759 = vmatprep.subr.bf16.mxu0 %v735
    %760 = vmatpush1.bf16.msra.mxu0 %v734
    %761 = vmatprep.subr.bf16.mxu0 0
    %762 = vmatpush2.bf16.msra.mxu0 0
    %763 = vmatprep.subr.bf16.mxu0 0
    %764 = vmatpush2.bf16.msra.mxu0 0
    %765 = vmatprep.subr.bf16.mxu0 0
    %766 = vmatpush2.bf16.msra.mxu0 0
    %767 = vmatprep.subr.bf16.mxu0 0
    %768 = vmatpush2.bf16.msra.mxu0 0
    %769 = vmatprep.subr.bf16.mxu0 0
    %770 = vmatpush2.bf16.msra.mxu0 0
    %771 = vmatprep.subr.bf16.mxu0 0
    %772 = vmatpush2.bf16.msra.mxu0 0
    %773 = vmatprep.subr.bf16.mxu0 0
    %774 = vmatpush2.bf16.msra.mxu0 0
    %775 = vmatprep.subr.bf16.mxu0 0
    %776 = vmatpush2.bf16.msra.mxu0 0
    %777 = vmatprep.mubr.bf16.mxu0 0
    %778 = vmatmul.mubr.bf16.gmra.mxu0 %v743
    %v779 = vpop.f32.mrf.mxu0
    %v780 = vadd.f32 %v715, %v779
    %v781 = vpop.f32.mrf.mxu0
    %v782 = vadd.f32 %v719, %v781
    %v783 = vpop.f32.mrf.mxu0
    %v784 = vpop.f32.mrf.mxu0
    %785 = vdwg.mxu0
    %v786 = vxor.u32 %v780, 2147483648
    %v787 = vxor.u32 %v782, 2147483648
    %v788 = vmul.f32 %v786, 1.442695
    %v789 = vpow.pop %v788
    %v790 = vmul.f32 %v787, 1.442695
    %v791 = vpow.pop %v790
    %v792 = vadd.f32 %v789, 1.0
    %v793 = vadd.f32 %v791, 1.0
    %v794 = vrcp.pop %v792
    %v795 = vmul.f32 1.0, %v794
    %v796 = vrcp.pop %v793
    %v797 = vmul.f32 1.0, %v796
    %v798 = vmul.f32 %v795, 0.08
    %v799 = vmul.f32 %v797, 0.08
    %v800 = vadd.f32 %v798, 0.96
    %v801 = vadd.f32 %v799, 0.96
    %v804 = vcombine.low %v800, %v801
    %v806 = vunpack.c.l.s4 1983009808
    %v807 = vunpack.c.0.s8 %v806
    %v808 = vlaneseq
    %v809 = vshrl.u32 %v808, 7
    %v810 = vsub.s32 %v807, %v809
    %v811 = vrot.slane %v804, %v810
    %813 = vst [vmem:[#allocation2] sm:$0xf] %v811
    // Predicated region
    $region30: #{forward.1} parent=1 // pred_check
      _
    $region31: #{forward.1} parent=1 // pred_check_branch
      %815 = sbr.rel (0) target = $region33
    $region32: #{forward.1} parent=1 // pred_region
      %s817 = ssub.s32 64, 64
      %818 = vsyncadd [#allocation3], %s817
      %s820 = sshll.u32 [#allocation2], 4
      %s821 = int_to_ptr.vmem [resolvable:$true] %s820
      %823 = dma.vmem_to_hbm [thread:$0]  %s821, 64, %s7, [#allocation3]
    $region33: #{forward.1} parent=1 // pred_fallthru
      _
    // Predicated region
    $region34: #{forward.1} parent=1 // pred_check
      _
    $region35: #{forward.1} parent=1 // pred_check_branch
      %825 = sbr.rel (0) target = $region37
    $region36: #{forward.1} parent=1 // pred_region
      %826 = dma.done [#allocation3], 64
    $region37: #{forward.1} parent=1 // pred_fallthru
      _
    %827 = vsyncpa [#allocation3], 1

</llo_original>
